<compile_context>
chip_gen: v5e
topology: v5e:2x2
jax: 0.10.0
libtpu: 0.0.40
codegen_flags: <defaults>
</compile_context>

<pallas_src>
import functools

import jax
import jax.numpy as jnp
from jax.experimental import pallas as pl
from jax.experimental.pallas import tpu as pltpu

EPS = 1e-5


def _round_up(n, m):
    return ((n + m - 1) // m) * m


def _sublane_rows(dtype):
    """Minimum row-tile multiple for dense sublane packing of `dtype`."""
    return max(8, 32 // jnp.dtype(dtype).itemsize)


def _vmem_budget_bytes():
    """~75% of per-core VMEM: ~48 MiB on v7x (64 MiB/TC), ~96 MiB on v5e/v6e."""
    phys = 64 * 1024 * 1024  # conservative fallback = v7x per-TC capacity
    try:
        phys = int(pltpu.get_tpu_info().vmem_capacity_bytes)
    except Exception:
        pass
    return (phys * 3) // 4


def _layernorm_finalize(y, p, d_valid, out_dtype):
    """bias + LayerNorm (one-pass f32 stats) + affine.  y: (tile, Dp) f32."""
    bias, gamma, beta = p[0:1, :], p[1:2, :], p[2:3, :]
    y = y + bias
    inv_d = 1.0 / float(d_valid)
    # One-pass statistics.  Padded lanes of y are exactly 0 (zero-padded W^T
    # columns and bias), so the raw sums equal the sums over the valid lanes and
    # no lane mask is needed.  Keep everything in f32 so the E[y^2] - mean^2
    # cancellation stays benign.
    mean = jnp.sum(y, axis=-1, keepdims=True) * inv_d
    mean_sq = jnp.sum(y * y, axis=-1, keepdims=True) * inv_d
    var = jnp.maximum(mean_sq - mean * mean, 0.0)
    y_norm = (y - mean) * jax.lax.rsqrt(var + EPS)
    return (y_norm * gamma + beta).astype(out_dtype)


def _postnorm_resident_kernel(x_ref, wt_ref, p_ref, o_ref, *, d_valid):
    # x_ref: (tile, Dp) rows (native dtype; bf16 is the fast MXU path)
    # wt_ref: (Dp, Dp) resident W^T    p_ref: (3, Dp) packed [bias, gamma, beta]
    y = jnp.dot(x_ref[...], wt_ref[...], preferred_element_type=jnp.float32)
    o_ref[...] = _layernorm_finalize(
        y, p_ref[...].astype(jnp.float32), d_valid, o_ref.dtype)


def _postnorm_ktiled_kernel(x_ref, wt_ref, p_ref, o_ref, acc_ref, *, d_valid):
    # Grid: (row tiles, K tiles).  acc_ref: (tile, Dp) f32 accumulator scratch.
    k = pl.program_id(1)

    @pl.when(k == 0)
    def _():
        acc_ref[...] = jnp.zeros_like(acc_ref)

    acc_ref[...] += jnp.dot(x_ref[...], wt_ref[...],
                            preferred_element_type=jnp.float32)

    @pl.when(k == pl.num_programs(1) - 1)
    def _():
        o_ref[...] = _layernorm_finalize(
            acc_ref[...], p_ref[...].astype(jnp.float32), d_valid, o_ref.dtype)


def prepare_postnorm_params(w, b, gamma, beta):
    """One-time prep (cache next to the weights, outside the hot path):
    transpose W to (in, out) layout, pack [bias, gamma, beta] into a single
    (3, D) array (one DMA), and pad the lane dim up to a multiple of 128."""
    d = w.shape[0]
    d_pad = _round_up(d, 128)
    wt = jnp.asarray(w.T)
    params = jnp.stack([b, gamma, beta], axis=0)
    if d_pad != d:
        wt = jnp.pad(wt, ((0, d_pad - d), (0, d_pad - d)))
        params = jnp.pad(params, ((0, 0), (0, d_pad - d)))
    return wt, params


def post_norm(x, wt, params, *, tile_rows=None, tk=512, force_k_tiling=False):
    """postNorm with fn = Linear(dim, dim): out = LayerNorm(x @ W^T + b).

    x:        (B, S, D) activations.  On v5e/v6e prefer bf16 x / bf16 W^T at the
              boundary (f32 matmul is emulated and ~3x slower on the MXU);
              accumulation and LayerNorm statistics stay f32 either way.
    wt, params: outputs of prepare_postnorm_params (pre-transposed, pre-padded,
              pre-packed) — prepare once and cache.
    tile_rows: row tile; default 512 for D<=1024 (HBM-bound), else 256.  Sweep
              256-1024 per generation; rounded to the dtype sublane multiple.
    tk:       K tile used by the K-tiled path (selected automatically when the
              resident W^T does not fit the per-core VMEM budget).
    """
    B, S, D = x.shape
    rows = B * S
    d_pad = wt.shape[0]
    assert wt.shape == (d_pad, d_pad), "wt must come from prepare_postnorm_params"
    assert params.shape == (3, d_pad)
    assert d_pad % 128 == 0 and d_pad >= D

    if tile_rows is None:
        tile_rows = 512 if d_pad <= 1024 else 256
    sub = _sublane_rows(x.dtype)
    tile = min(_round_up(tile_rows, sub), _round_up(rows, sub))
    num_row_tiles = pl.cdiv(rows, tile)   # ragged last row block masked by Pallas

    x2 = x.reshape(rows, D)
    if d_pad != D:
        # Zero the padded K lanes feeding the matmul.  Real deployments should
        # ship D % 128 == 0 so this extra HBM pass never happens.
        x2 = jnp.pad(x2, ((0, 0), (0, d_pad - D)))

    itm_x = jnp.dtype(x.dtype).itemsize
    itm_w = jnp.dtype(wt.dtype).itemsize
    itm_p = jnp.dtype(params.dtype).itemsize
    vmem_budget = _vmem_budget_bytes()

    # Resident-weight footprint: single-buffered W^T, double-buffered x/out,
    # ~3 f32 (tile, Dp) temporaries for the LayerNorm chain, plus params.
    resident_bytes = (d_pad * d_pad * itm_w
                      + 4 * tile * d_pad * itm_x
                      + 3 * d_pad * itm_p
                      + 3 * tile * d_pad * 4)
    use_k_tiling = force_k_tiling or resident_bytes > vmem_budget

    cost = pl.CostEstimate(
        flops=2 * rows * D * D,
        transcendentals=rows,  # one rsqrt per row
        bytes_accessed=(2 * rows * d_pad * itm_x           # x read + out write
                        + d_pad * d_pad * itm_w            # W^T read
                        + 3 * d_pad * itm_p))              # params read
    out_shape = jax.ShapeDtypeStruct((rows, d_pad), x.dtype)

    def const_spec(shape, index_map, single_buffer):
        # Constant-index operands: no point double-buffering a block whose
        # index_map is (0, 0) for every grid step — single-buffer it.
        if single_buffer:
            return pl.BlockSpec(shape, index_map, pipeline_mode=pl.Buffered(1))
        return pl.BlockSpec(shape, index_map)

    def build_resident(single_buffer):
        return pl.pallas_call(
            functools.partial(_postnorm_resident_kernel, d_valid=D),
            out_shape=out_shape,
            grid_spec=pltpu.PrefetchScalarGridSpec(
                num_scalar_prefetch=0,
                grid=(num_row_tiles,),
                in_specs=[
                    pl.BlockSpec((tile, d_pad), lambda i: (i, 0)),           # x rows
                    const_spec((d_pad, d_pad), lambda i: (0, 0), single_buffer),  # W^T
                    const_spec((3, d_pad), lambda i: (0, 0), single_buffer),      # params
                ],
                out_specs=pl.BlockSpec((tile, d_pad), lambda i: (i, 0)),
            ),
            compiler_params=pltpu.CompilerParams(
                dimension_semantics=("parallel",),
                vmem_limit_bytes=vmem_budget),
            cost_estimate=cost,
        )

    def build_ktiled(single_buffer):
        tk_eff = 128
        for cand in (tk, 512, 256, 128):
            if 128 <= cand <= d_pad and d_pad % cand == 0 and cand % 128 == 0:
                tk_eff = cand
                break
        return pl.pallas_call(
            functools.partial(_postnorm_ktiled_kernel, d_valid=D),
            out_shape=out_shape,
            grid_spec=pltpu.PrefetchScalarGridSpec(
                num_scalar_prefetch=0,
                grid=(num_row_tiles, d_pad // tk_eff),
                in_specs=[
                    pl.BlockSpec((tile, tk_eff), lambda i, k: (i, k)),        # x K-slab
                    pl.BlockSpec((tk_eff, d_pad), lambda i, k: (k, 0)),       # W^T K-slab
                    const_spec((3, d_pad), lambda i, k: (0, 0), single_buffer),
                ],
                out_specs=pl.BlockSpec((tile, d_pad), lambda i, k: (i, 0)),
                scratch_shapes=[pltpu.VMEM((tile, d_pad), jnp.float32)],
            ),
            compiler_params=pltpu.CompilerParams(
                dimension_semantics=("parallel", "arbitrary"),
                vmem_limit_bytes=vmem_budget),
            cost_estimate=cost,
        )

    build = build_ktiled if use_k_tiling else build_resident
    try:
        out2 = build(True)(x2, wt, params)
    except Exception:
        # pl.Buffered(1) (single-buffered constant operands) unsupported on this
        # JAX version: retry with default double-buffering.  Any unrelated
        # failure re-raises from the fallback as well.
        out2 = build(False)(x2, wt, params)

    if d_pad != D:
        out2 = out2[:, :D]
    return out2.reshape(B, S, D)


def post_norm_ref(x, w, b, gamma, beta):
    """Pure-JAX reference matching PyTorch postNorm(dim, Linear(dim, dim))."""
    y = jnp.einsum("bsd,od->bso", x, w) + b
    mean = jnp.mean(y, axis=-1, keepdims=True)
    var = jnp.mean((y - mean) ** 2, axis=-1, keepdims=True)
    return (y - mean) / jnp.sqrt(var + EPS) * gamma + beta


if __name__ == "__main__":
    key = jax.random.PRNGKey(0)
    k_x, k_w, k_b, k_x2, k_w2, k_b2 = jax.random.split(key, 6)

    # --- Resident-weight path (D not a multiple of 128 exercises the lane pad).
    B, S, D = 2, 8, 32
    x = jax.random.normal(k_x, (B, S, D), dtype=jnp.float32)
    # fn = Linear(D, D): weight (out, in), bias (out,); LayerNorm init gamma=1, beta=0.
    w = jax.random.normal(k_w, (D, D), dtype=jnp.float32) * (1.0 / jnp.sqrt(D))
    b = jax.random.normal(k_b, (D,), dtype=jnp.float32) * 0.1
    gamma = jnp.ones((D,), dtype=jnp.float32)
    beta = jnp.zeros((D,), dtype=jnp.float32)

    wt, params = prepare_postnorm_params(w, b, gamma, beta)  # hoisted, done once
    ref = post_norm_ref(x, w, b, gamma, beta)

    out = jax.block_until_ready(post_norm(x, wt, params))
    assert out.shape == (B, S, D)
    assert jnp.allclose(out, ref, atol=1e-4, rtol=1e-4), "f32 resident mismatch"

    # bf16 operand fast path (native bf16 MXU, f32 accumulation + f32 LN stats).
    out_bf16 = jax.block_until_ready(
        post_norm(x.astype(jnp.bfloat16), wt.astype(jnp.bfloat16), params))
    assert jnp.allclose(out_bf16.astype(jnp.float32), ref,
                        atol=7.5e-2, rtol=7.5e-2), "bf16 resident mismatch"

    # --- K-tiled accumulator path (forced; tk=128 over D=256 -> 2 K steps).
    D2 = 256
    x_k = jax.random.normal(k_x2, (B, S, D2), dtype=jnp.float32)
    w2 = jax.random.normal(k_w2, (D2, D2), dtype=jnp.float32) * (1.0 / jnp.sqrt(D2))
    b2 = jax.random.normal(k_b2, (D2,), dtype=jnp.float32) * 0.1
    gamma2 = jnp.ones((D2,), dtype=jnp.float32)
    beta2 = jnp.zeros((D2,), dtype=jnp.float32)

    wt2, params2 = prepare_postnorm_params(w2, b2, gamma2, beta2)
    ref2 = post_norm_ref(x_k, w2, b2, gamma2, beta2)
    out_k = jax.block_until_ready(
        post_norm(x_k, wt2, params2, force_k_tiling=True, tk=128))
    assert out_k.shape == (B, S, D2)
    assert jnp.allclose(out_k, ref2, atol=1e-3, rtol=1e-3), "f32 K-tiled mismatch"

    print("KERNEL_OK")
</pallas_src>

<mosaic_0001>
module attributes {stable_mosaic.version = 11 : i64} {
  func.func @_postnorm_resident_kernel(%arg0: i32, %arg1: memref<16x128xf32, #tpu.memory_space<vmem>>, %arg2: memref<128x128xf32, #tpu.memory_space<vmem>>, %arg3: memref<3x128xf32, #tpu.memory_space<vmem>>, %arg4: memref<16x128xf32, #tpu.memory_space<vmem>>) attributes {dimension_semantics = [#tpu.dimension_semantics<parallel>], iteration_bounds = array<i64: 1>, scalar_prefetch = 0 : i64, scratch_operands = 0 : i64, tpu.core_type = #tpu.core_type<tc>, window_params = [{transform_indices = @transform_0, window_bounds = array<i64: 16, 128>}, {pipeline_mode = #tpu.pipeline_mode<synchronous>, transform_indices = @transform_1, window_bounds = array<i64: 128, 128>}, {pipeline_mode = #tpu.pipeline_mode<synchronous>, transform_indices = @transform_2, window_bounds = array<i64: 3, 128>}, {transform_indices = @transform_3, window_bounds = array<i64: 16, 128>}]} {
    %c0 = arith.constant 0 : index
    %c0_0 = arith.constant 0 : index
    %0 = vector.load %arg1[%c0, %c0_0] : memref<16x128xf32, #tpu.memory_space<vmem>>, vector<16x128xf32>
    %c0_1 = arith.constant 0 : index
    %c0_2 = arith.constant 0 : index
    %1 = vector.load %arg2[%c0_1, %c0_2] : memref<128x128xf32, #tpu.memory_space<vmem>>, vector<128x128xf32>
    %cst = arith.constant dense<0.000000e+00> : vector<16x128xf32>
    %2 = tpu.matmul %0, %1, %cst {dimension_numbers = #tpu.dot_dimension_numbers<[1], [0], [0], [1], [0, 0, 1, 1], [], []>} : vector<16x128xf32>, vector<128x128xf32>, vector<16x128xf32> -> vector<16x128xf32>
    %c0_3 = arith.constant 0 : index
    %c0_4 = arith.constant 0 : index
    %3 = vector.load %arg3[%c0_3, %c0_4] : memref<3x128xf32, #tpu.memory_space<vmem>>, vector<3x128xf32>
    %4 = vector.extract_strided_slice %3 {offsets = [0, 0], sizes = [1, 128], strides = [1, 1]} : vector<3x128xf32> to vector<1x128xf32>
    %5 = vector.extract_strided_slice %3 {offsets = [1, 0], sizes = [1, 128], strides = [1, 1]} : vector<3x128xf32> to vector<1x128xf32>
    %6 = vector.extract_strided_slice %3 {offsets = [2, 0], sizes = [1, 128], strides = [1, 1]} : vector<3x128xf32> to vector<1x128xf32>
    %7 = vector.broadcast %4 : vector<1x128xf32> to vector<16x128xf32>
    %8 = arith.addf %2, %7 : vector<16x128xf32>
    %cst_5 = arith.constant dense<0.000000e+00> : vector<16xf32>
    %9 = vector.multi_reduction <add>, %8, %cst_5 [1] : vector<16x128xf32> to vector<16xf32>
    %10 = vector.shape_cast %9 : vector<16xf32> to vector<16x1xf32>
    %cst_6 = arith.constant 3.125000e-02 : f32
    %11 = vector.broadcast %cst_6 : f32 to vector<16x1xf32>
    %12 = arith.mulf %10, %11 : vector<16x1xf32>
    %13 = arith.mulf %8, %8 : vector<16x128xf32>
    %cst_7 = arith.constant dense<0.000000e+00> : vector<16xf32>
    %14 = vector.multi_reduction <add>, %13, %cst_7 [1] : vector<16x128xf32> to vector<16xf32>
    %15 = vector.shape_cast %14 : vector<16xf32> to vector<16x1xf32>
    %cst_8 = arith.constant 3.125000e-02 : f32
    %16 = vector.broadcast %cst_8 : f32 to vector<16x1xf32>
    %17 = arith.mulf %15, %16 : vector<16x1xf32>
    %18 = arith.mulf %12, %12 : vector<16x1xf32>
    %19 = arith.subf %17, %18 : vector<16x1xf32>
    %cst_9 = arith.constant 0.000000e+00 : f32
    %20 = vector.broadcast %cst_9 : f32 to vector<16x1xf32>
    %21 = arith.maximumf %19, %20 : vector<16x1xf32>
    %22 = vector.broadcast %12 : vector<16x1xf32> to vector<16x128xf32>
    %23 = arith.subf %8, %22 : vector<16x128xf32>
    %cst_10 = arith.constant 9.99999974E-6 : f32
    %24 = vector.broadcast %cst_10 : f32 to vector<16x1xf32>
    %25 = arith.addf %21, %24 : vector<16x1xf32>
    %26 = math.rsqrt %25 : vector<16x1xf32>
    %27 = vector.broadcast %26 : vector<16x1xf32> to vector<16x128xf32>
    %28 = arith.mulf %23, %27 : vector<16x128xf32>
    %29 = vector.broadcast %5 : vector<1x128xf32> to vector<16x128xf32>
    %30 = arith.mulf %28, %29 : vector<16x128xf32>
    %31 = vector.broadcast %6 : vector<1x128xf32> to vector<16x128xf32>
    %32 = arith.addf %30, %31 : vector<16x128xf32>
    %c0_11 = arith.constant 0 : index
    %c0_12 = arith.constant 0 : index
    %33 = vector.load %arg4[%c0_11, %c0_12] : memref<16x128xf32, #tpu.memory_space<vmem>>, vector<16x128xf32>
    tpu.vector_store %arg4[%c0_11, %c0_12], %32 {strides = array<i32>} : memref<16x128xf32, #tpu.memory_space<vmem>>, vector<16x128xf32>,
    return
  }
  func.func @transform_0(%arg0: i32) -> (i32, i32) {
    %c0_i32 = arith.constant 0 : i32
    %c0_i32_0 = arith.constant 0 : i32
    return %arg0, %c0_i32 : i32, i32
  }
  func.func @transform_1(%arg0: i32) -> (i32, i32) {
    %c0_i32 = arith.constant 0 : i32
    %c0_i32_0 = arith.constant 0 : i32
    %c0_i32_1 = arith.constant 0 : i32
    return %c0_i32, %c0_i32_0 : i32, i32
  }
  func.func @transform_2(%arg0: i32) -> (i32, i32) {
    %c0_i32 = arith.constant 0 : i32
    %c0_i32_0 = arith.constant 0 : i32
    %c0_i32_1 = arith.constant 0 : i32
    return %c0_i32, %c0_i32_0 : i32, i32
  }
  func.func @transform_3(%arg0: i32) -> (i32, i32) {
    %c0_i32 = arith.constant 0 : i32
    %c0_i32_0 = arith.constant 0 : i32
    return %arg0, %c0_i32 : i32, i32
  }
}

module attributes {stable_mosaic.version = 11 : i64} {
  func.func @_postnorm_resident_kernel(%arg0: i32, %arg1: memref<16x128xf32, #tpu.memory_space<vmem>>, %arg2: memref<128x128xf32, #tpu.memory_space<vmem>>, %arg3: memref<3x128xf32, #tpu.memory_space<vmem>>, %arg4: memref<16x128xf32, #tpu.memory_space<vmem>>) attributes {dimension_semantics = [#tpu.dimension_semantics<parallel>], iteration_bounds = array<i64: 1>, scalar_prefetch = 0 : i64, scratch_operands = 0 : i64, tpu.core_type = #tpu.core_type<tc>, window_params = [{transform_indices = @transform_0, window_bounds = array<i64: 16, 128>}, {pipeline_mode = #tpu.pipeline_mode<synchronous>, transform_indices = @transform_1, window_bounds = array<i64: 128, 128>}, {pipeline_mode = #tpu.pipeline_mode<synchronous>, transform_indices = @transform_2, window_bounds = array<i64: 3, 128>}, {transform_indices = @transform_3, window_bounds = array<i64: 16, 128>}]} {
    %c0 = arith.constant 0 : index
    %c0_0 = arith.constant 0 : index
    %0 = vector.load %arg1[%c0, %c0_0] : memref<16x128xf32, #tpu.memory_space<vmem>>, vector<16x128xf32>
    %c0_1 = arith.constant 0 : index
    %c0_2 = arith.constant 0 : index
    %1 = vector.load %arg2[%c0_1, %c0_2] : memref<128x128xf32, #tpu.memory_space<vmem>>, vector<128x128xf32>
    %cst = arith.constant dense<0.000000e+00> : vector<16x128xf32>
    %2 = tpu.matmul %0, %1, %cst {dimension_numbers = #tpu.dot_dimension_numbers<[1], [0], [0], [1], [0, 0, 1, 1], [], []>} : vector<16x128xf32>, vector<128x128xf32>, vector<16x128xf32> -> vector<16x128xf32>
    %c0_3 = arith.constant 0 : index
    %c0_4 = arith.constant 0 : index
    %3 = vector.load %arg3[%c0_3, %c0_4] : memref<3x128xf32, #tpu.memory_space<vmem>>, vector<3x128xf32>
    %4 = vector.extract_strided_slice %3 {offsets = [0, 0], sizes = [1, 128], strides = [1, 1]} : vector<3x128xf32> to vector<1x128xf32>
    %5 = vector.extract_strided_slice %3 {offsets = [1, 0], sizes = [1, 128], strides = [1, 1]} : vector<3x128xf32> to vector<1x128xf32>
    %6 = vector.extract_strided_slice %3 {offsets = [2, 0], sizes = [1, 128], strides = [1, 1]} : vector<3x128xf32> to vector<1x128xf32>
    %7 = vector.broadcast %4 : vector<1x128xf32> to vector<16x128xf32>
    %8 = arith.addf %2, %7 : vector<16x128xf32>
    %cst_5 = arith.constant dense<0.000000e+00> : vector<16xf32>
    %9 = vector.multi_reduction <add>, %8, %cst_5 [1] : vector<16x128xf32> to vector<16xf32>
    %10 = vector.shape_cast %9 : vector<16xf32> to vector<16x1xf32>
    %cst_6 = arith.constant 3.125000e-02 : f32
    %11 = vector.broadcast %cst_6 : f32 to vector<16x1xf32>
    %12 = arith.mulf %10, %11 : vector<16x1xf32>
    %13 = arith.mulf %8, %8 : vector<16x128xf32>
    %cst_7 = arith.constant dense<0.000000e+00> : vector<16xf32>
    %14 = vector.multi_reduction <add>, %13, %cst_7 [1] : vector<16x128xf32> to vector<16xf32>
    %15 = vector.shape_cast %14 : vector<16xf32> to vector<16x1xf32>
    %cst_8 = arith.constant 3.125000e-02 : f32
    %16 = vector.broadcast %cst_8 : f32 to vector<16x1xf32>
    %17 = arith.mulf %15, %16 : vector<16x1xf32>
    %18 = arith.mulf %12, %12 : vector<16x1xf32>
    %19 = arith.subf %17, %18 : vector<16x1xf32>
    %cst_9 = arith.constant 0.000000e+00 : f32
    %20 = vector.broadcast %cst_9 : f32 to vector<16x1xf32>
    %21 = arith.maximumf %19, %20 : vector<16x1xf32>
    %22 = vector.broadcast %12 : vector<16x1xf32> to vector<16x128xf32>
    %23 = arith.subf %8, %22 : vector<16x128xf32>
    %cst_10 = arith.constant 9.99999974E-6 : f32
    %24 = vector.broadcast %cst_10 : f32 to vector<16x1xf32>
    %25 = arith.addf %21, %24 : vector<16x1xf32>
    %26 = math.rsqrt %25 : vector<16x1xf32>
    %27 = vector.broadcast %26 : vector<16x1xf32> to vector<16x128xf32>
    %28 = arith.mulf %23, %27 : vector<16x128xf32>
    %29 = vector.broadcast %5 : vector<1x128xf32> to vector<16x128xf32>
    %30 = arith.mulf %28, %29 : vector<16x128xf32>
    %31 = vector.broadcast %6 : vector<1x128xf32> to vector<16x128xf32>
    %32 = arith.addf %30, %31 : vector<16x128xf32>
    %c0_11 = arith.constant 0 : index
    %c0_12 = arith.constant 0 : index
    %33 = vector.load %arg4[%c0_11, %c0_12] : memref<16x128xf32, #tpu.memory_space<vmem>>, vector<16x128xf32>
    tpu.vector_store %arg4[%c0_11, %c0_12], %32 {strides = array<i32>} : memref<16x128xf32, #tpu.memory_space<vmem>>, vector<16x128xf32>,
    return
  }
  func.func @transform_0(%arg0: i32) -> (i32, i32) {
    %c0_i32 = arith.constant 0 : i32
    %c0_i32_0 = arith.constant 0 : i32
    return %arg0, %c0_i32 : i32, i32
  }
  func.func @transform_1(%arg0: i32) -> (i32, i32) {
    %c0_i32 = arith.constant 0 : i32
    %c0_i32_0 = arith.constant 0 : i32
    %c0_i32_1 = arith.constant 0 : i32
    return %c0_i32, %c0_i32_0 : i32, i32
  }
  func.func @transform_2(%arg0: i32) -> (i32, i32) {
    %c0_i32 = arith.constant 0 : i32
    %c0_i32_0 = arith.constant 0 : i32
    %c0_i32_1 = arith.constant 0 : i32
    return %c0_i32, %c0_i32_0 : i32, i32
  }
  func.func @transform_3(%arg0: i32) -> (i32, i32) {
    %c0_i32 = arith.constant 0 : i32
    %c0_i32_0 = arith.constant 0 : i32
    return %arg0, %c0_i32 : i32, i32
  }
}

</mosaic_0001>

<llo_original>
// kernel: tpu_custom_call.1
$region0: #{tpu_custom_call.1}
  #allocation0 [shape = 'u32[]', space=smem, size = 0x4, offset = 0x4, fixed_abs, tag = 'smem constant byte address 0x4 - core index']
  #allocation1 [shape = 'u32[72,128]{1,0:T(1,128)}', space=vmem, size = 0x9000, scoped, tag = 'internal scratch']
  %s0 = inlined_call_operand.hbm [shape: f32[16,128], index: 0, kind: input, shape index: {}]
  %s1 = inlined_call_operand.hbm [shape: f32[128,128], index: 1, kind: input, shape index: {}]
  %s2 = inlined_call_operand.hbm [shape: f32[3,128], index: 2, kind: input, shape index: {}]
  %s3 = inlined_call_operand.hbm [shape: f32[16,128], index: 3, kind: output, shape index: {}]
  %s4 = sld [smem:[#allocation0]]
  $region34: #{tpu_custom_call.1} parent=0
    _
  %s6 = ssub.s32 1, %s4
  %s7 = scalar_select 0, %s6, %s4
  $region1: #{tpu_custom_call.1} parent=0
    #allocation2 [shape = 'u8[8192]{0}', space=vmem, size = 0x2000, scoped, tag = 'input window, operand 0, single buffered']
    #allocation3 [shape = 's32[1]{0}', space=sflag, size = 0x4, scoped, tag = 'scoped memory for tpu_custom_call.1']
    #allocation4 [shape = 's32[1]{0}', space=sflag, size = 0x4, scoped, tag = 'scoped memory for tpu_custom_call.1']
    #allocation5 [shape = 'u8[65536]{0}', space=vmem, size = 0x10000, scoped, tag = 'input window, operand 1, single buffered']
    #allocation6 [shape = 's32[1]{0}', space=sflag, size = 0x4, scoped, tag = 'scoped memory for tpu_custom_call.1']
    #allocation7 [shape = 'u8[2048]{0}', space=vmem, size = 0x800, scoped, tag = 'input window, operand 2, single buffered']
    #allocation8 [shape = 'u8[8192]{0}', space=vmem, size = 0x2000, scoped, tag = 'output window, operand 0, single buffered']
    %8 = vsyncpa [#allocation3], 0
    %9 = vsyncpa [#allocation6], 0
    %10 = vsyncpa [#allocation4], 0
    // Predicated region
    $region2: #{tpu_custom_call.1} parent=1 // pred_check
      _
    $region3: #{tpu_custom_call.1} parent=1 // pred_check_branch
      %12 = sbr.rel (0) target = $region5
    $region4: #{tpu_custom_call.1} parent=1 // pred_region
      %14 = vsyncadd [#allocation3], 0
      %s15 = sshll.u32 %s0, 4
      %s16 = int_to_ptr.hbm [resolvable:$true] %s15
      %s17 = sshll.u32 [#allocation2], 4
      %s18 = int_to_ptr.vmem [resolvable:$true] %s17
      %23 = dma.hbm_to_vmem [thread:$0]  %s16, 256, %s18, [#allocation3], 128, 128, 8
    $region5: #{tpu_custom_call.1} parent=1 // pred_fallthru
      _
    // Predicated region
    $region6: #{tpu_custom_call.1} parent=1 // pred_check
      _
    $region7: #{tpu_custom_call.1} parent=1 // pred_check_branch
      %25 = sbr.rel (0) target = $region9
    $region8: #{tpu_custom_call.1} parent=1 // pred_region
      %27 = vsyncadd [#allocation6], 0
      %s28 = sshll.u32 %s1, 4
      %s29 = int_to_ptr.hbm [resolvable:$true] %s28
      %s30 = sshll.u32 [#allocation5], 4
      %s31 = int_to_ptr.vmem [resolvable:$true] %s30
      %36 = dma.hbm_to_vmem [thread:$0]  %s29, 2048, %s31, [#allocation6], 128, 128, 8
    $region9: #{tpu_custom_call.1} parent=1 // pred_fallthru
      _
    // Predicated region
    $region10: #{tpu_custom_call.1} parent=1 // pred_check
      _
    $region11: #{tpu_custom_call.1} parent=1 // pred_check_branch
      %38 = sbr.rel (0) target = $region13
    $region12: #{tpu_custom_call.1} parent=1 // pred_region
      %40 = vsyncadd [#allocation6], 0
      %s42 = sshll.u32 %s2, 4
      %s43 = int_to_ptr.hbm [resolvable:$true] %s42
      %s44 = sshll.u32 [#allocation7], 4
      %s45 = int_to_ptr.vmem [resolvable:$true] %s44
      %47 = dma.hbm_to_vmem [thread:$0]  %s43, 64, %s45, [#allocation6]
    $region13: #{tpu_custom_call.1} parent=1 // pred_fallthru
      _
    // Predicated region
    $region14: #{tpu_custom_call.1} parent=1 // pred_check
      _
    $region15: #{tpu_custom_call.1} parent=1 // pred_check_branch
      %49 = sbr.rel (0) target = $region17
    $region16: #{tpu_custom_call.1} parent=1 // pred_region
      %51 = dma.done [#allocation3], 256
    $region17: #{tpu_custom_call.1} parent=1 // pred_fallthru
      _
    // Predicated region
    $region18: #{tpu_custom_call.1} parent=1 // pred_check
      _
    $region19: #{tpu_custom_call.1} parent=1 // pred_check_branch
      %53 = sbr.rel (0) target = $region21
    $region20: #{tpu_custom_call.1} parent=1 // pred_region
      %55 = dma.done [#allocation6], 2048
    $region21: #{tpu_custom_call.1} parent=1 // pred_fallthru
      _
    // Predicated region
    $region22: #{tpu_custom_call.1} parent=1 // pred_check
      _
    $region23: #{tpu_custom_call.1} parent=1 // pred_check_branch
      %57 = sbr.rel (0) target = $region25
    $region24: #{tpu_custom_call.1} parent=1 // pred_region
      %59 = dma.done [#allocation6], 64
    $region25: #{tpu_custom_call.1} parent=1 // pred_fallthru
      _
    %v60 = vld [vmem:[#allocation2] sm:$0xff]
    %v61 = vld [vmem:[#allocation2 + $0x8] sm:$0xff]
    %v62 = vld [vmem:[#allocation5] sm:$0xff]
    %v63 = vld [vmem:[#allocation5 + $0x8] sm:$0xff]
    %v64 = vld [vmem:[#allocation5 + $0x10] sm:$0xff]
    %v65 = vld [vmem:[#allocation5 + $0x18] sm:$0xff]
    %v66 = vld [vmem:[#allocation5 + $0x20] sm:$0xff]
    %v67 = vld [vmem:[#allocation5 + $0x28] sm:$0xff]
    %v68 = vld [vmem:[#allocation5 + $0x30] sm:$0xff]
    %v69 = vld [vmem:[#allocation5 + $0x38] sm:$0xff]
    %v70 = vld [vmem:[#allocation5 + $0x40] sm:$0xff]
    %v71 = vld [vmem:[#allocation5 + $0x48] sm:$0xff]
    %v72 = vld [vmem:[#allocation5 + $0x50] sm:$0xff]
    %v73 = vld [vmem:[#allocation5 + $0x58] sm:$0xff]
    %v74 = vld [vmem:[#allocation5 + $0x60] sm:$0xff]
    %v75 = vld [vmem:[#allocation5 + $0x68] sm:$0xff]
    %v76 = vld [vmem:[#allocation5 + $0x70] sm:$0xff]
    %v77 = vld [vmem:[#allocation5 + $0x78] sm:$0xff]
    %v78 = vld [vmem:[#allocation7] sm:$0x7]
    %v79 = vperm.slane %v78, 0
    %80 = vmatpush.msra.mxu0 %v77
    %81 = vmatpush.msra.mxu0 %v76
    %82 = vmatpush.msra.mxu0 %v75
    %83 = vmatpush.msra.mxu0 %v74
    %84 = vmatpush.msra.mxu0 %v73
    %85 = vmatpush.msra.mxu0 %v72
    %86 = vmatpush.msra.mxu0 %v71
    %87 = vmatpush.msra.mxu0 %v70
    %88 = vmatpush.msra.mxu0 %v69
    %89 = vmatpush.msra.mxu0 %v68
    %90 = vmatpush.msra.mxu0 %v67
    %91 = vmatpush.msra.mxu0 %v66
    %92 = vmatpush.msra.mxu0 %v65
    %93 = vmatpush.msra.mxu0 %v64
    %94 = vmatpush.msra.mxu0 %v63
    %95 = vmatpush.msra.mxu0 %v62
    %96 = vmatmul.f32.gmra.mxu0 %v60
    %v97 = vpop.f32.mrf.mxu0
    %v98 = vadd.f32 %v79, %v97
    %99 = vmatmul.f32.gmra.mxu0 %v61
    %v100 = vpop.f32.mrf.mxu0
    %v101 = vadd.f32 %v79, %v100
    %102 = vdwg.mxu0
    %103 = vadd.xlane.f32.xlu0 %v98
    %v104 = vpop.xlane.xlu0 %103
    %105 = vadd.xlane.f32.xlu0 %v101
    %v106 = vpop.xlane.xlu0 %105
    %v107 = vmul.f32 %v104, 0.03125
    %v108 = vmul.f32 %v106, 0.03125
    %v109 = vmul.f32 %v98, %v98
    %v110 = vmul.f32 %v101, %v101
    %111 = vadd.xlane.f32.xlu0 %v109
    %v112 = vpop.xlane.xlu0 %111
    %113 = vadd.xlane.f32.xlu0 %v110
    %v114 = vpop.xlane.xlu0 %113
    %v115 = vmul.f32 %v112, 0.03125
    %v116 = vmul.f32 %v114, 0.03125
    %v117 = vmul.f32 %v107, %v107
    %v118 = vmul.f32 %v108, %v108
    %v119 = vsub.f32 %v115, %v117
    %v120 = vsub.f32 %v116, %v118
    %v121 = vmax.f32 %v119, 0.0
    %v122 = vmax.f32 %v120, 0.0
    %v123 = vsub.f32 %v98, %v107
    %v124 = vsub.f32 %v101, %v108
    %v125 = vadd.f32 %v121, 1e-05
    %v126 = vadd.f32 %v122, 1e-05
    %v127 = vrsqrt.pop %v125
    %v128 = vmul.f32 %v127, %v125
    %v129 = vmul.f32 %v128, %v127
    %v130 = vmul.f32 0.5, %v129
    %v131 = vsub.f32 1.5, %v130
    %v132 = vmul.f32 %v127, %v131
    %vm133 = vweird.f32 %v125
    %vm134 = vweird.f32 %v127
    %vm135 = vmor %vm133, %vm134
    %v136 = vsel %vm135, %v127, %v132
    %v137 = vrsqrt.pop %v126
    %v138 = vmul.f32 %v137, %v126
    %v139 = vmul.f32 %v138, %v137
    %v140 = vmul.f32 0.5, %v139
    %v141 = vsub.f32 1.5, %v140
    %v142 = vmul.f32 %v137, %v141
    %vm143 = vweird.f32 %v126
    %vm144 = vweird.f32 %v137
    %vm145 = vmor %vm143, %vm144
    %v146 = vsel %vm145, %v137, %v142
    %v147 = vmul.f32 %v123, %v136
    %v148 = vmul.f32 %v124, %v146
    %v149 = vperm.slane %v78, 1
    %v150 = vmul.f32 %v147, %v149
    %v151 = vmul.f32 %v148, %v149
    %v152 = vperm.slane %v78, 2
    %v153 = vadd.f32 %v150, %v152
    %v154 = vadd.f32 %v151, %v152
    %155 = vst [vmem:[#allocation8] sm:$0xff] %v153
    %156 = vst [vmem:[#allocation8 + $0x8] sm:$0xff] %v154
    // Predicated region
    $region26: #{tpu_custom_call.1} parent=1 // pred_check
      _
    $region27: #{tpu_custom_call.1} parent=1 // pred_check_branch
      %158 = sbr.rel (0) target = $region29
    $region28: #{tpu_custom_call.1} parent=1 // pred_region
      %160 = vsyncadd [#allocation4], 0
      %s161 = sshll.u32 [#allocation8], 4
      %s162 = int_to_ptr.vmem [resolvable:$true] %s161
      %s163 = sshll.u32 %s3, 4
      %s164 = int_to_ptr.hbm [resolvable:$true] %s163
      %169 = dma.vmem_to_hbm [thread:$0]  %s162, 256, %s164, [#allocation4], 128, 128, 8
    $region29: #{tpu_custom_call.1} parent=1 // pred_fallthru
      _
    // Predicated region
    $region30: #{tpu_custom_call.1} parent=1 // pred_check
      _
    $region31: #{tpu_custom_call.1} parent=1 // pred_check_branch
      %171 = sbr.rel (0) target = $region33
    $region32: #{tpu_custom_call.1} parent=1 // pred_region
      %173 = dma.done [#allocation4], 256
    $region33: #{tpu_custom_call.1} parent=1 // pred_fallthru
      _
    %174 = vsyncpa [#allocation3], 1
    %175 = vsyncpa [#allocation6], 1
    %176 = vsyncpa [#allocation4], 1

// kernel: tpu_custom_call.1
$region0: #{tpu_custom_call.1}
  #allocation0 [shape = 'u32[]', space=smem, size = 0x4, offset = 0x4, fixed_abs, tag = 'smem constant byte address 0x4 - core index']
  #allocation1 [shape = 'u32[72,128]{1,0:T(1,128)}', space=vmem, size = 0x9000, scoped, tag = 'internal scratch']
  %s0 = inlined_call_operand.hbm [shape: f32[16,128], index: 0, kind: input, shape index: {}]
  %s1 = inlined_call_operand.hbm [shape: f32[128,128], index: 1, kind: input, shape index: {}]
  %s2 = inlined_call_operand.hbm [shape: f32[3,128], index: 2, kind: input, shape index: {}]
  %s3 = inlined_call_operand.hbm [shape: f32[16,128], index: 3, kind: output, shape index: {}]
  %s4 = sld [smem:[#allocation0]]
  $region34: #{tpu_custom_call.1} parent=0
    _
  %s6 = ssub.s32 1, %s4
  %s7 = scalar_select 0, %s6, %s4
  $region1: #{tpu_custom_call.1} parent=0
    #allocation2 [shape = 'u8[8192]{0}', space=vmem, size = 0x2000, scoped, tag = 'input window, operand 0, single buffered']
    #allocation3 [shape = 's32[1]{0}', space=sflag, size = 0x4, scoped, tag = 'scoped memory for tpu_custom_call.1']
    #allocation4 [shape = 's32[1]{0}', space=sflag, size = 0x4, scoped, tag = 'scoped memory for tpu_custom_call.1']
    #allocation5 [shape = 'u8[65536]{0}', space=vmem, size = 0x10000, scoped, tag = 'input window, operand 1, single buffered']
    #allocation6 [shape = 's32[1]{0}', space=sflag, size = 0x4, scoped, tag = 'scoped memory for tpu_custom_call.1']
    #allocation7 [shape = 'u8[2048]{0}', space=vmem, size = 0x800, scoped, tag = 'input window, operand 2, single buffered']
    #allocation8 [shape = 'u8[8192]{0}', space=vmem, size = 0x2000, scoped, tag = 'output window, operand 0, single buffered']
    %8 = vsyncpa [#allocation3], 0
    %9 = vsyncpa [#allocation6], 0
    %10 = vsyncpa [#allocation4], 0
    // Predicated region
    $region2: #{tpu_custom_call.1} parent=1 // pred_check
      _
    $region3: #{tpu_custom_call.1} parent=1 // pred_check_branch
      %12 = sbr.rel (0) target = $region5
    $region4: #{tpu_custom_call.1} parent=1 // pred_region
      %14 = vsyncadd [#allocation3], 0
      %s15 = sshll.u32 %s0, 4
      %s16 = int_to_ptr.hbm [resolvable:$true] %s15
      %s17 = sshll.u32 [#allocation2], 4
      %s18 = int_to_ptr.vmem [resolvable:$true] %s17
      %23 = dma.hbm_to_vmem [thread:$0]  %s16, 256, %s18, [#allocation3], 128, 128, 8
    $region5: #{tpu_custom_call.1} parent=1 // pred_fallthru
      _
    // Predicated region
    $region6: #{tpu_custom_call.1} parent=1 // pred_check
      _
    $region7: #{tpu_custom_call.1} parent=1 // pred_check_branch
      %25 = sbr.rel (0) target = $region9
    $region8: #{tpu_custom_call.1} parent=1 // pred_region
      %27 = vsyncadd [#allocation6], 0
      %s28 = sshll.u32 %s1, 4
      %s29 = int_to_ptr.hbm [resolvable:$true] %s28
      %s30 = sshll.u32 [#allocation5], 4
      %s31 = int_to_ptr.vmem [resolvable:$true] %s30
      %36 = dma.hbm_to_vmem [thread:$0]  %s29, 2048, %s31, [#allocation6], 128, 128, 8
    $region9: #{tpu_custom_call.1} parent=1 // pred_fallthru
      _
    // Predicated region
    $region10: #{tpu_custom_call.1} parent=1 // pred_check
      _
    $region11: #{tpu_custom_call.1} parent=1 // pred_check_branch
      %38 = sbr.rel (0) target = $region13
    $region12: #{tpu_custom_call.1} parent=1 // pred_region
      %40 = vsyncadd [#allocation6], 0
      %s42 = sshll.u32 %s2, 4
      %s43 = int_to_ptr.hbm [resolvable:$true] %s42
      %s44 = sshll.u32 [#allocation7], 4
      %s45 = int_to_ptr.vmem [resolvable:$true] %s44
      %47 = dma.hbm_to_vmem [thread:$0]  %s43, 64, %s45, [#allocation6]
    $region13: #{tpu_custom_call.1} parent=1 // pred_fallthru
      _
    // Predicated region
    $region14: #{tpu_custom_call.1} parent=1 // pred_check
      _
    $region15: #{tpu_custom_call.1} parent=1 // pred_check_branch
      %49 = sbr.rel (0) target = $region17
    $region16: #{tpu_custom_call.1} parent=1 // pred_region
      %51 = dma.done [#allocation3], 256
    $region17: #{tpu_custom_call.1} parent=1 // pred_fallthru
      _
    // Predicated region
    $region18: #{tpu_custom_call.1} parent=1 // pred_check
      _
    $region19: #{tpu_custom_call.1} parent=1 // pred_check_branch
      %53 = sbr.rel (0) target = $region21
    $region20: #{tpu_custom_call.1} parent=1 // pred_region
      %55 = dma.done [#allocation6], 2048
    $region21: #{tpu_custom_call.1} parent=1 // pred_fallthru
      _
    // Predicated region
    $region22: #{tpu_custom_call.1} parent=1 // pred_check
      _
    $region23: #{tpu_custom_call.1} parent=1 // pred_check_branch
      %57 = sbr.rel (0) target = $region25
    $region24: #{tpu_custom_call.1} parent=1 // pred_region
      %59 = dma.done [#allocation6], 64
    $region25: #{tpu_custom_call.1} parent=1 // pred_fallthru
      _
    %v60 = vld [vmem:[#allocation2] sm:$0xff]
    %v61 = vld [vmem:[#allocation2 + $0x8] sm:$0xff]
    %v62 = vld [vmem:[#allocation5] sm:$0xff]
    %v63 = vld [vmem:[#allocation5 + $0x8] sm:$0xff]
    %v64 = vld [vmem:[#allocation5 + $0x10] sm:$0xff]
    %v65 = vld [vmem:[#allocation5 + $0x18] sm:$0xff]
    %v66 = vld [vmem:[#allocation5 + $0x20] sm:$0xff]
    %v67 = vld [vmem:[#allocation5 + $0x28] sm:$0xff]
    %v68 = vld [vmem:[#allocation5 + $0x30] sm:$0xff]
    %v69 = vld [vmem:[#allocation5 + $0x38] sm:$0xff]
    %v70 = vld [vmem:[#allocation5 + $0x40] sm:$0xff]
    %v71 = vld [vmem:[#allocation5 + $0x48] sm:$0xff]
    %v72 = vld [vmem:[#allocation5 + $0x50] sm:$0xff]
    %v73 = vld [vmem:[#allocation5 + $0x58] sm:$0xff]
    %v74 = vld [vmem:[#allocation5 + $0x60] sm:$0xff]
    %v75 = vld [vmem:[#allocation5 + $0x68] sm:$0xff]
    %v76 = vld [vmem:[#allocation5 + $0x70] sm:$0xff]
    %v77 = vld [vmem:[#allocation5 + $0x78] sm:$0xff]
    %v78 = vld [vmem:[#allocation7] sm:$0x7]
    %v79 = vperm.slane %v78, 0
    %80 = vmatpush.msra.mxu0 %v77
    %81 = vmatpush.msra.mxu0 %v76
    %82 = vmatpush.msra.mxu0 %v75
    %83 = vmatpush.msra.mxu0 %v74
    %84 = vmatpush.msra.mxu0 %v73
    %85 = vmatpush.msra.mxu0 %v72
    %86 = vmatpush.msra.mxu0 %v71
    %87 = vmatpush.msra.mxu0 %v70
    %88 = vmatpush.msra.mxu0 %v69
    %89 = vmatpush.msra.mxu0 %v68
    %90 = vmatpush.msra.mxu0 %v67
    %91 = vmatpush.msra.mxu0 %v66
    %92 = vmatpush.msra.mxu0 %v65
    %93 = vmatpush.msra.mxu0 %v64
    %94 = vmatpush.msra.mxu0 %v63
    %95 = vmatpush.msra.mxu0 %v62
    %96 = vmatmul.f32.gmra.mxu0 %v60
    %v97 = vpop.f32.mrf.mxu0
    %v98 = vadd.f32 %v79, %v97
    %99 = vmatmul.f32.gmra.mxu0 %v61
    %v100 = vpop.f32.mrf.mxu0
    %v101 = vadd.f32 %v79, %v100
    %102 = vdwg.mxu0
    %103 = vadd.xlane.f32.xlu0 %v98
    %v104 = vpop.xlane.xlu0 %103
    %105 = vadd.xlane.f32.xlu0 %v101
    %v106 = vpop.xlane.xlu0 %105
    %v107 = vmul.f32 %v104, 0.03125
    %v108 = vmul.f32 %v106, 0.03125
    %v109 = vmul.f32 %v98, %v98
    %v110 = vmul.f32 %v101, %v101
    %111 = vadd.xlane.f32.xlu0 %v109
    %v112 = vpop.xlane.xlu0 %111
    %113 = vadd.xlane.f32.xlu0 %v110
    %v114 = vpop.xlane.xlu0 %113
    %v115 = vmul.f32 %v112, 0.03125
    %v116 = vmul.f32 %v114, 0.03125
    %v117 = vmul.f32 %v107, %v107
    %v118 = vmul.f32 %v108, %v108
    %v119 = vsub.f32 %v115, %v117
    %v120 = vsub.f32 %v116, %v118
    %v121 = vmax.f32 %v119, 0.0
    %v122 = vmax.f32 %v120, 0.0
    %v123 = vsub.f32 %v98, %v107
    %v124 = vsub.f32 %v101, %v108
    %v125 = vadd.f32 %v121, 1e-05
    %v126 = vadd.f32 %v122, 1e-05
    %v127 = vrsqrt.pop %v125
    %v128 = vmul.f32 %v127, %v125
    %v129 = vmul.f32 %v128, %v127
    %v130 = vmul.f32 0.5, %v129
    %v131 = vsub.f32 1.5, %v130
    %v132 = vmul.f32 %v127, %v131
    %vm133 = vweird.f32 %v125
    %vm134 = vweird.f32 %v127
    %vm135 = vmor %vm133, %vm134
    %v136 = vsel %vm135, %v127, %v132
    %v137 = vrsqrt.pop %v126
    %v138 = vmul.f32 %v137, %v126
    %v139 = vmul.f32 %v138, %v137
    %v140 = vmul.f32 0.5, %v139
    %v141 = vsub.f32 1.5, %v140
    %v142 = vmul.f32 %v137, %v141
    %vm143 = vweird.f32 %v126
    %vm144 = vweird.f32 %v137
    %vm145 = vmor %vm143, %vm144
    %v146 = vsel %vm145, %v137, %v142
    %v147 = vmul.f32 %v123, %v136
    %v148 = vmul.f32 %v124, %v146
    %v149 = vperm.slane %v78, 1
    %v150 = vmul.f32 %v147, %v149
    %v151 = vmul.f32 %v148, %v149
    %v152 = vperm.slane %v78, 2
    %v153 = vadd.f32 %v150, %v152
    %v154 = vadd.f32 %v151, %v152
    %155 = vst [vmem:[#allocation8] sm:$0xff] %v153
    %156 = vst [vmem:[#allocation8 + $0x8] sm:$0xff] %v154
    // Predicated region
    $region26: #{tpu_custom_call.1} parent=1 // pred_check
      _
    $region27: #{tpu_custom_call.1} parent=1 // pred_check_branch
      %158 = sbr.rel (0) target = $region29
    $region28: #{tpu_custom_call.1} parent=1 // pred_region
      %160 = vsyncadd [#allocation4], 0
      %s161 = sshll.u32 [#allocation8], 4
      %s162 = int_to_ptr.vmem [resolvable:$true] %s161
      %s163 = sshll.u32 %s3, 4
      %s164 = int_to_ptr.hbm [resolvable:$true] %s163
      %169 = dma.vmem_to_hbm [thread:$0]  %s162, 256, %s164, [#allocation4], 128, 128, 8
    $region29: #{tpu_custom_call.1} parent=1 // pred_fallthru
      _
    // Predicated region
    $region30: #{tpu_custom_call.1} parent=1 // pred_check
      _
    $region31: #{tpu_custom_call.1} parent=1 // pred_check_branch
      %171 = sbr.rel (0) target = $region33
    $region32: #{tpu_custom_call.1} parent=1 // pred_region
      %173 = dma.done [#allocation4], 256
    $region33: #{tpu_custom_call.1} parent=1 // pred_fallthru
      _
    %174 = vsyncpa [#allocation3], 1
    %175 = vsyncpa [#allocation6], 1
    %176 = vsyncpa [#allocation4], 1

</llo_original>
